<compile_context>
chip_gen: v5e
topology: v5e:2x2
jax: 0.10.0
libtpu: 0.0.40
codegen_flags: <defaults>
</compile_context>

<pallas_src>
import functools

import jax
import jax.numpy as jnp
from jax import lax
from jax.experimental import pallas as pl
from jax.experimental.pallas import tpu as pltpu


def _round_up(x, m):
    return (x + m - 1) // m * m


def _mdn_kernel(x_ref,
                w1_ref, b1_ref,
                w2_ref, b2_ref,
                wh_ref, bh_ref,
                out_ref, *, K, KF):
    """One batch tile of the full MDN forward; everything lane-dense in VMEM."""
    x = x_ref[...]

    # input2hidden: Linear -> ReLU -> Linear -> ReLU
    h = jnp.dot(x, w1_ref[...], preferred_element_type=jnp.float32) + b1_ref[...]
    h = jnp.maximum(h, 0.0)
    h = jnp.dot(h, w2_ref[...], preferred_element_type=jnp.float32) + b2_ref[...]
    h = jnp.maximum(h, 0.0)

    # Fused head: one MXU push producing (TM, NP) with NP a multiple of 128.
    z = jnp.dot(h, wh_ref[...], preferred_element_type=jnp.float32) + bh_ref[...]

    NP = z.shape[-1]
    # Single-row lane masks, broadcast over the batch tile.
    lane = lax.broadcasted_iota(jnp.int32, (1, NP), 1)
    in_mw = lane < K                                      # softmax lanes
    in_means = jnp.logical_and(lane >= K, lane < K + KF)  # identity lanes
    # remaining (incl. padding) lanes take the sigmoid branch; padding unused.

    neg_big = jnp.float32(-1e30)
    logits = jnp.where(in_mw, z, neg_big)
    m = jnp.max(logits, axis=-1, keepdims=True)           # (TM, 1)

    # ONE exp pass serves the softmax numerator/denominator AND the sigmoid.
    arg = jnp.where(in_mw, z - m, -z)
    arg = jnp.minimum(arg, jnp.float32(30.0))              # no inf on sigmoid lanes
    e = jnp.exp(arg)

    e_mw = jnp.where(in_mw, e, 0.0)
    denom = jnp.sum(e_mw, axis=-1, keepdims=True)          # (TM, 1)

    # One exact full-tile divide: softmax lanes e/denom, sigmoid lanes 1/(1+e).
    num = jnp.where(in_mw, e, 1.0)
    den = jnp.where(in_mw, denom, 1.0 + e)
    frac = num / den

    out_ref[...] = jnp.where(in_means, z, frac)


def prepare_params(params):
    """One-time parameter prep: fuse the three head projections into a single
    zero-padded, lane-dense (H, NP) weight / (1, NP) bias (hoisted out of the
    jitted forward)."""
    H = params["w1"].shape[1]
    K = params["wmw"].shape[1]
    KF = params["wm"].shape[1]
    N = K + 2 * KF
    NP = _round_up(N, 128)

    w_head = jnp.zeros((H, NP), jnp.float32)
    w_head = w_head.at[:, :K].set(params["wmw"])
    w_head = w_head.at[:, K:K + KF].set(params["wm"])
    w_head = w_head.at[:, K + KF:N].set(params["ws"])
    b_head = jnp.zeros((1, NP), jnp.float32)
    b_head = b_head.at[:, :K].set(params["bmw"])
    b_head = b_head.at[:, K:K + KF].set(params["bm"])
    b_head = b_head.at[:, K + KF:N].set(params["bs"])

    return dict(w1=params["w1"], b1=params["b1"],
                w2=params["w2"], b2=params["b2"],
                w_head=w_head, b_head=b_head)


@functools.partial(jax.jit,
                   static_argnames=("n_components", "frame_dim", "tile_m"))
def mixture_gaussians_net(x, prepared, *, n_components, frame_dim, tile_m=1024):
    """Forward pass. prepared = prepare_params(raw_params).

    Returns (mixture_weights (B,K), means (B,K*F), std_devs (B,K*F)).
    """
    B, E = x.shape
    H = prepared["w1"].shape[1]
    NP = prepared["w_head"].shape[1]
    K = n_components
    KF = n_components * frame_dim
    N = K + 2 * KF

    # Batch tiling: multiples of 8 sublanes; aim for >=2 grid steps so the
    # "parallel" batch axis can shard across both TensorCores on v7x and the
    # x/output DMAs double-buffer.
    TM = min(tile_m, _round_up(max(pl.cdiv(B, 2), 1), 8))
    B_pad = _round_up(B, TM)
    if B_pad != B:
        x = jnp.pad(x, ((0, B_pad - B), (0, 0)))

    def resident(shape):
        # Weights/biases: same block every grid step -> stay VMEM-resident.
        return pl.BlockSpec(shape, lambda i: (0,) * len(shape))

    kernel = functools.partial(_mdn_kernel, K=K, KF=KF)

    slab = pl.pallas_call(
        kernel,
        out_shape=jax.ShapeDtypeStruct((B_pad, NP), jnp.float32),
        grid=(B_pad // TM,),
        in_specs=[
            pl.BlockSpec((TM, E), lambda i: (i, 0)),
            resident(prepared["w1"].shape),
            resident(prepared["b1"].shape),
            resident(prepared["w2"].shape),
            resident(prepared["b2"].shape),
            resident((H, NP)),
            resident((1, NP)),
        ],
        out_specs=pl.BlockSpec((TM, NP), lambda i: (i, 0)),
        compiler_params=pltpu.CompilerParams(
            dimension_semantics=("parallel",)),
    )(x, prepared["w1"], prepared["b1"], prepared["w2"], prepared["b2"],
      prepared["w_head"], prepared["b_head"])

    mixture_weights = slab[:B, :K]
    means = slab[:B, K:K + KF]
    std_devs = slab[:B, K + KF:N]
    return mixture_weights, means, std_devs


def init_params(key, encoding_dim, frame_dim, n_components, hidden_dim):
    """Deterministic synthetic parameters (shapes follow the PyTorch module).
    Weights are stored (in_dim, out_dim) = W_torch.T; biases (1, out_dim)."""
    ks = jax.random.split(key, 10)
    KF = n_components * frame_dim

    def lin(kw, kb, fan_in, fan_out):
        lim = 1.0 / jnp.sqrt(fan_in)
        w = jax.random.uniform(kw, (fan_in, fan_out), jnp.float32, -lim, lim)
        b = jax.random.uniform(kb, (1, fan_out), jnp.float32, -lim, lim)
        return w, b

    w1, b1 = lin(ks[0], ks[1], encoding_dim, hidden_dim)
    w2, b2 = lin(ks[2], ks[3], hidden_dim, hidden_dim)
    wmw, bmw = lin(ks[4], ks[5], hidden_dim, n_components)
    wm, bm = lin(ks[6], ks[7], hidden_dim, KF)
    ws, bs = lin(ks[8], ks[9], hidden_dim, KF)
    return dict(w1=w1, b1=b1, w2=w2, b2=b2, wmw=wmw, bmw=bmw,
                wm=wm, bm=bm, ws=ws, bs=bs)


def reference_forward(x, p):
    h = jnp.maximum(x @ p["w1"] + p["b1"], 0.0)
    h = jnp.maximum(h @ p["w2"] + p["b2"], 0.0)
    mw = jax.nn.softmax(h @ p["wmw"] + p["bmw"], axis=-1)
    means = h @ p["wm"] + p["bm"]
    stds = jax.nn.sigmoid(h @ p["ws"] + p["bs"])
    return mw, means, stds


if __name__ == "__main__":
    # Small shapes consistent with the module's forward signature.
    batch_size = 8
    encoding_dim = 32
    hidden_dim = 32
    n_components = 4
    frame_dim = 8

    key = jax.random.PRNGKey(0)
    k_x, k_p = jax.random.split(key)
    x = jax.random.normal(k_x, (batch_size, encoding_dim), jnp.float32)
    params = init_params(k_p, encoding_dim, frame_dim, n_components, hidden_dim)
    prepared = prepare_params(params)

    mw, means, stds = mixture_gaussians_net(
        x, prepared, n_components=n_components, frame_dim=frame_dim)
    jax.block_until_ready((mw, means, stds))

    # Sanity-check against a pure-JAX reference.  Softmax/sigmoid now use exact
    # f32 division; remaining slack only covers MXU f32 matmul-precision
    # differences between the Pallas kernel and XLA on real hardware.
    mw_r, means_r, stds_r = reference_forward(x, params)
    assert mw.shape == (batch_size, n_components)
    assert means.shape == (batch_size, n_components * frame_dim)
    assert stds.shape == (batch_size, n_components * frame_dim)
    assert jnp.allclose(mw, mw_r, atol=2e-2, rtol=2e-2)
    assert jnp.allclose(means, means_r, atol=2e-2, rtol=2e-2)
    assert jnp.allclose(stds, stds_r, atol=2e-2, rtol=2e-2)
    # Exact normalization: rows of mixture_weights sum to 1 regardless of
    # matmul precision (softmax self-normalizes with the exact divide).
    assert jnp.allclose(jnp.sum(mw, axis=-1), 1.0, atol=1e-3)

    print("KERNEL_OK")
</pallas_src>

<mosaic_0001>
module attributes {stable_mosaic.version = 11 : i64} {
  func.func @_mdn_kernel(%arg0: i32, %arg1: memref<8x32xf32, #tpu.memory_space<vmem>>, %arg2: memref<32x32xf32, #tpu.memory_space<vmem>>, %arg3: memref<1x32xf32, #tpu.memory_space<vmem>>, %arg4: memref<32x32xf32, #tpu.memory_space<vmem>>, %arg5: memref<1x32xf32, #tpu.memory_space<vmem>>, %arg6: memref<32x128xf32, #tpu.memory_space<vmem>>, %arg7: memref<1x128xf32, #tpu.memory_space<vmem>>, %arg8: memref<8x128xf32, #tpu.memory_space<vmem>>) attributes {dimension_semantics = [#tpu.dimension_semantics<parallel>], iteration_bounds = array<i64: 1>, scalar_prefetch = 0 : i64, scratch_operands = 0 : i64, tpu.core_type = #tpu.core_type<tc>, window_params = [{transform_indices = @transform_0, window_bounds = array<i64: 8, 32>}, {pipeline_mode = #tpu.pipeline_mode<synchronous>, transform_indices = @transform_1, window_bounds = array<i64: 32, 32>}, {pipeline_mode = #tpu.pipeline_mode<synchronous>, transform_indices = @transform_2, window_bounds = array<i64: 1, 32>}, {pipeline_mode = #tpu.pipeline_mode<synchronous>, transform_indices = @transform_3, window_bounds = array<i64: 32, 32>}, {pipeline_mode = #tpu.pipeline_mode<synchronous>, transform_indices = @transform_4, window_bounds = array<i64: 1, 32>}, {pipeline_mode = #tpu.pipeline_mode<synchronous>, transform_indices = @transform_5, window_bounds = array<i64: 32, 128>}, {pipeline_mode = #tpu.pipeline_mode<synchronous>, transform_indices = @transform_6, window_bounds = array<i64: 1, 128>}, {transform_indices = @transform_7, window_bounds = array<i64: 8, 128>}]} {
    %c0 = arith.constant 0 : index
    %c0_0 = arith.constant 0 : index
    %0 = vector.load %arg1[%c0, %c0_0] : memref<8x32xf32, #tpu.memory_space<vmem>>, vector<8x32xf32>
    %c0_1 = arith.constant 0 : index
    %c0_2 = arith.constant 0 : index
    %1 = vector.load %arg2[%c0_1, %c0_2] : memref<32x32xf32, #tpu.memory_space<vmem>>, vector<32x32xf32>
    %cst = arith.constant dense<0.000000e+00> : vector<8x32xf32>
    %2 = tpu.matmul %0, %1, %cst {dimension_numbers = #tpu.dot_dimension_numbers<[1], [0], [0], [1], [0, 0, 1, 1], [], []>} : vector<8x32xf32>, vector<32x32xf32>, vector<8x32xf32> -> vector<8x32xf32>
    %c0_3 = arith.constant 0 : index
    %c0_4 = arith.constant 0 : index
    %3 = vector.load %arg3[%c0_3, %c0_4] : memref<1x32xf32, #tpu.memory_space<vmem>>, vector<1x32xf32>
    %4 = vector.broadcast %3 : vector<1x32xf32> to vector<8x32xf32>
    %5 = arith.addf %2, %4 : vector<8x32xf32>
    %cst_5 = arith.constant 0.000000e+00 : f32
    %6 = vector.broadcast %cst_5 : f32 to vector<8x32xf32>
    %7 = arith.maximumf %5, %6 : vector<8x32xf32>
    %c0_6 = arith.constant 0 : index
    %c0_7 = arith.constant 0 : index
    %8 = vector.load %arg4[%c0_6, %c0_7] : memref<32x32xf32, #tpu.memory_space<vmem>>, vector<32x32xf32>
    %cst_8 = arith.constant dense<0.000000e+00> : vector<8x32xf32>
    %9 = tpu.matmul %7, %8, %cst_8 {dimension_numbers = #tpu.dot_dimension_numbers<[1], [0], [0], [1], [0, 0, 1, 1], [], []>} : vector<8x32xf32>, vector<32x32xf32>, vector<8x32xf32> -> vector<8x32xf32>
    %c0_9 = arith.constant 0 : index
    %c0_10 = arith.constant 0 : index
    %10 = vector.load %arg5[%c0_9, %c0_10] : memref<1x32xf32, #tpu.memory_space<vmem>>, vector<1x32xf32>
    %11 = vector.broadcast %10 : vector<1x32xf32> to vector<8x32xf32>
    %12 = arith.addf %9, %11 : vector<8x32xf32>
    %cst_11 = arith.constant 0.000000e+00 : f32
    %13 = vector.broadcast %cst_11 : f32 to vector<8x32xf32>
    %14 = arith.maximumf %12, %13 : vector<8x32xf32>
    %c0_12 = arith.constant 0 : index
    %c0_13 = arith.constant 0 : index
    %15 = vector.load %arg6[%c0_12, %c0_13] : memref<32x128xf32, #tpu.memory_space<vmem>>, vector<32x128xf32>
    %cst_14 = arith.constant dense<0.000000e+00> : vector<8x128xf32>
    %16 = tpu.matmul %14, %15, %cst_14 {dimension_numbers = #tpu.dot_dimension_numbers<[1], [0], [0], [1], [0, 0, 1, 1], [], []>} : vector<8x32xf32>, vector<32x128xf32>, vector<8x128xf32> -> vector<8x128xf32>
    %c0_15 = arith.constant 0 : index
    %c0_16 = arith.constant 0 : index
    %17 = vector.load %arg7[%c0_15, %c0_16] : memref<1x128xf32, #tpu.memory_space<vmem>>, vector<1x128xf32>
    %18 = vector.broadcast %17 : vector<1x128xf32> to vector<8x128xf32>
    %19 = arith.addf %16, %18 : vector<8x128xf32>
    %20 = tpu.iota {dimensions = array<i32: 1>} : vector<1x128xi32>
    %c4_i32 = arith.constant 4 : i32
    %21 = vector.broadcast %c4_i32 : i32 to vector<1x128xi32>
    %22 = arith.cmpi slt, %20, %21 : vector<1x128xi32>
    %c4_i32_17 = arith.constant 4 : i32
    %23 = vector.broadcast %c4_i32_17 : i32 to vector<1x128xi32>
    %24 = arith.cmpi sge, %20, %23 : vector<1x128xi32>
    %c36_i32 = arith.constant 36 : i32
    %25 = vector.broadcast %c36_i32 : i32 to vector<1x128xi32>
    %26 = arith.cmpi slt, %20, %25 : vector<1x128xi32>
    %27 = arith.andi %24, %26 : vector<1x128xi1>
    %cst_18 = arith.constant -1.000000e+30 : f32
    %28 = vector.shape_cast %22 : vector<1x128xi1> to vector<1x128xi1>
    %29 = vector.broadcast %28 : vector<1x128xi1> to vector<8x128xi1>
    %30 = vector.broadcast %cst_18 : f32 to vector<8x128xf32>
    %31 = arith.select %29, %19, %30 : vector<8x128xi1>, vector<8x128xf32>
    %cst_19 = arith.constant dense<0xFF800000> : vector<8xf32>
    %32 = vector.multi_reduction <maximumf>, %31, %cst_19 [1] : vector<8x128xf32> to vector<8xf32>
    %33 = vector.shape_cast %32 : vector<8xf32> to vector<8x1xf32>
    %34 = vector.broadcast %33 : vector<8x1xf32> to vector<8x128xf32>
    %35 = arith.subf %19, %34 : vector<8x128xf32>
    %cst_20 = arith.constant 0.000000e+00 : f32
    %36 = vector.broadcast %cst_20 : f32 to vector<8x128xf32>
    %37 = arith.subf %36, %19 : vector<8x128xf32>
    %38 = vector.shape_cast %22 : vector<1x128xi1> to vector<1x128xi1>
    %39 = vector.broadcast %38 : vector<1x128xi1> to vector<8x128xi1>
    %40 = arith.select %39, %35, %37 : vector<8x128xi1>, vector<8x128xf32>
    %cst_21 = arith.constant 3.000000e+01 : f32
    %41 = vector.broadcast %cst_21 : f32 to vector<8x128xf32>
    %42 = arith.minimumf %40, %41 : vector<8x128xf32>
    %43 = math.exp %42 : vector<8x128xf32>
    %cst_22 = arith.constant 0.000000e+00 : f32
    %44 = vector.shape_cast %22 : vector<1x128xi1> to vector<1x128xi1>
    %45 = vector.broadcast %44 : vector<1x128xi1> to vector<8x128xi1>
    %46 = vector.broadcast %cst_22 : f32 to vector<8x128xf32>
    %47 = arith.select %45, %43, %46 : vector<8x128xi1>, vector<8x128xf32>
    %cst_23 = arith.constant dense<0.000000e+00> : vector<8xf32>
    %48 = vector.multi_reduction <add>, %47, %cst_23 [1] : vector<8x128xf32> to vector<8xf32>
    %49 = vector.shape_cast %48 : vector<8xf32> to vector<8x1xf32>
    %cst_24 = arith.constant 1.000000e+00 : f32
    %50 = vector.shape_cast %22 : vector<1x128xi1> to vector<1x128xi1>
    %51 = vector.broadcast %50 : vector<1x128xi1> to vector<8x128xi1>
    %52 = vector.broadcast %cst_24 : f32 to vector<8x128xf32>
    %53 = arith.select %51, %43, %52 : vector<8x128xi1>, vector<8x128xf32>
    %cst_25 = arith.constant 1.000000e+00 : f32
    %54 = vector.broadcast %cst_25 : f32 to vector<8x128xf32>
    %55 = arith.addf %54, %43 : vector<8x128xf32>
    %56 = vector.shape_cast %22 : vector<1x128xi1> to vector<1x128xi1>
    %57 = vector.broadcast %56 : vector<1x128xi1> to vector<8x128xi1>
    %58 = vector.shape_cast %49 : vector<8x1xf32> to vector<8x1xf32>
    %59 = vector.broadcast %58 : vector<8x1xf32> to vector<8x128xf32>
    %60 = arith.select %57, %59, %55 : vector<8x128xi1>, vector<8x128xf32>
    %61 = arith.divf %53, %60 : vector<8x128xf32>
    %62 = vector.shape_cast %27 : vector<1x128xi1> to vector<1x128xi1>
    %63 = vector.broadcast %62 : vector<1x128xi1> to vector<8x128xi1>
    %64 = arith.select %63, %19, %61 : vector<8x128xi1>, vector<8x128xf32>
    %c0_26 = arith.constant 0 : index
    %c0_27 = arith.constant 0 : index
    %65 = vector.load %arg8[%c0_26, %c0_27] : memref<8x128xf32, #tpu.memory_space<vmem>>, vector<8x128xf32>
    tpu.vector_store %arg8[%c0_26, %c0_27], %64 {strides = array<i32>} : memref<8x128xf32, #tpu.memory_space<vmem>>, vector<8x128xf32>,
    return
  }
  func.func @transform_0(%arg0: i32) -> (i32, i32) {
    %c0_i32 = arith.constant 0 : i32
    %c0_i32_0 = arith.constant 0 : i32
    return %arg0, %c0_i32 : i32, i32
  }
  func.func @transform_1(%arg0: i32) -> (i32, i32) {
    %c0_i32 = arith.constant 0 : i32
    %c0_i32_0 = arith.constant 0 : i32
    %c0_i32_1 = arith.constant 0 : i32
    return %c0_i32, %c0_i32_0 : i32, i32
  }
  func.func @transform_2(%arg0: i32) -> (i32, i32) {
    %c0_i32 = arith.constant 0 : i32
    %c0_i32_0 = arith.constant 0 : i32
    %c0_i32_1 = arith.constant 0 : i32
    return %c0_i32, %c0_i32_0 : i32, i32
  }
  func.func @transform_3(%arg0: i32) -> (i32, i32) {
    %c0_i32 = arith.constant 0 : i32
    %c0_i32_0 = arith.constant 0 : i32
    %c0_i32_1 = arith.constant 0 : i32
    return %c0_i32, %c0_i32_0 : i32, i32
  }
  func.func @transform_4(%arg0: i32) -> (i32, i32) {
    %c0_i32 = arith.constant 0 : i32
    %c0_i32_0 = arith.constant 0 : i32
    %c0_i32_1 = arith.constant 0 : i32
    return %c0_i32, %c0_i32_0 : i32, i32
  }
  func.func @transform_5(%arg0: i32) -> (i32, i32) {
    %c0_i32 = arith.constant 0 : i32
    %c0_i32_0 = arith.constant 0 : i32
    %c0_i32_1 = arith.constant 0 : i32
    return %c0_i32, %c0_i32_0 : i32, i32
  }
  func.func @transform_6(%arg0: i32) -> (i32, i32) {
    %c0_i32 = arith.constant 0 : i32
    %c0_i32_0 = arith.constant 0 : i32
    %c0_i32_1 = arith.constant 0 : i32
    return %c0_i32, %c0_i32_0 : i32, i32
  }
  func.func @transform_7(%arg0: i32) -> (i32, i32) {
    %c0_i32 = arith.constant 0 : i32
    %c0_i32_0 = arith.constant 0 : i32
    return %arg0, %c0_i32 : i32, i32
  }
}

</mosaic_0001>

<llo_original>
// kernel: mixture_gaussians_net.1
$region0: #{mixture_gaussians_net.1}
  #allocation0 [shape = 'u32[]', space=smem, size = 0x4, offset = 0x4, fixed_abs, tag = 'smem constant byte address 0x4 - core index']
  #allocation1 [shape = 'u32[72,128]{1,0:T(1,128)}', space=vmem, size = 0x9000, scoped, tag = 'internal scratch']
  %s0 = inlined_call_operand.hbm [shape: f32[8,32], index: 0, kind: input, shape index: {}]
  %s1 = inlined_call_operand.hbm [shape: f32[32,32], index: 1, kind: input, shape index: {}]
  %s2 = inlined_call_operand.vmem [shape: f32[1,32], index: 2, kind: input, shape index: {}]
  %s3 = inlined_call_operand.hbm [shape: f32[32,32], index: 3, kind: input, shape index: {}]
  %s4 = inlined_call_operand.vmem [shape: f32[1,32], index: 4, kind: input, shape index: {}]
  %s5 = inlined_call_operand.hbm [shape: f32[32,128], index: 5, kind: input, shape index: {}]
  %s6 = inlined_call_operand.vmem [shape: f32[1,128], index: 6, kind: input, shape index: {}]
  %s7 = inlined_call_operand.vmem [shape: f32[8,128], index: 7, kind: output, shape index: {}]
  %s8 = sld [smem:[#allocation0]]
  $region54: #{mixture_gaussians_net.1} parent=0
    _
  %s10 = ssub.s32 1, %s8
  %s11 = scalar_select 0, %s10, %s8
  $region1: #{mixture_gaussians_net.1} parent=0
    #allocation2 [shape = 'u8[4096]{0}', space=vmem, size = 0x1000, scoped, tag = 'input window, operand 0, single buffered']
    #allocation3 [shape = 's32[1]{0}', space=sflag, size = 0x4, scoped, tag = 'scoped memory for mixture_gaussians_net.1']
    #allocation4 [shape = 'u8[16384]{0}', space=vmem, size = 0x4000, scoped, tag = 'input window, operand 1, single buffered']
    #allocation5 [shape = 's32[1]{0}', space=sflag, size = 0x4, scoped, tag = 'scoped memory for mixture_gaussians_net.1']
    #allocation6 [shape = 'u8[16384]{0}', space=vmem, size = 0x4000, scoped, tag = 'input window, operand 3, single buffered']
    #allocation7 [shape = 'u8[16384]{0}', space=vmem, size = 0x4000, scoped, tag = 'input window, operand 5, single buffered']
    #allocation8 [shape = 's32[1]{0}', space=sflag, size = 0x4, scoped, tag = 'scoped memory for mixture_gaussians_net.1']
    %12 = vsyncpa [#allocation3], 0
    %13 = vsyncpa [#allocation5], 0
    %14 = vsyncpa [#allocation8], 0
    // Predicated region
    $region2: #{mixture_gaussians_net.1} parent=1 // pred_check
      _
    $region3: #{mixture_gaussians_net.1} parent=1 // pred_check_branch
      %16 = sbr.rel (0) target = $region5
    $region4: #{mixture_gaussians_net.1} parent=1 // pred_region
      %18 = vsyncadd [#allocation3], 0
      %s20 = sshll.u32 %s0, 4
      %s21 = int_to_ptr.hbm [resolvable:$true] %s20
      %s22 = sshll.u32 [#allocation2], 4
      %s23 = int_to_ptr.vmem [resolvable:$true] %s22
      %25 = dma.hbm_to_vmem [thread:$0]  %s21, 128, %s23, [#allocation3]
    $region5: #{mixture_gaussians_net.1} parent=1 // pred_fallthru
      _
    // Predicated region
    $region6: #{mixture_gaussians_net.1} parent=1 // pred_check
      _
    $region7: #{mixture_gaussians_net.1} parent=1 // pred_check_branch
      %27 = sbr.rel (0) target = $region9
    $region8: #{mixture_gaussians_net.1} parent=1 // pred_region
      %29 = vsyncadd [#allocation5], 0
      %s30 = sshll.u32 %s1, 4
      %s31 = int_to_ptr.hbm [resolvable:$true] %s30
      %s32 = sshll.u32 [#allocation4], 4
      %s33 = int_to_ptr.vmem [resolvable:$true] %s32
      %38 = dma.hbm_to_vmem [thread:$0]  %s31, 512, %s33, [#allocation5], 128, 128, 8
    $region9: #{mixture_gaussians_net.1} parent=1 // pred_fallthru
      _
    // Predicated region
    $region10: #{mixture_gaussians_net.1} parent=1 // pred_check
      _
    $region11: #{mixture_gaussians_net.1} parent=1 // pred_check_branch
      %40 = sbr.rel (0) target = $region13
    $region12: #{mixture_gaussians_net.1} parent=1 // pred_region
      _
    $region13: #{mixture_gaussians_net.1} parent=1 // pred_fallthru
      _
    // Predicated region
    $region14: #{mixture_gaussians_net.1} parent=1 // pred_check
      _
    $region15: #{mixture_gaussians_net.1} parent=1 // pred_check_branch
      %42 = sbr.rel (0) target = $region17
    $region16: #{mixture_gaussians_net.1} parent=1 // pred_region
      %44 = vsyncadd [#allocation5], 0
      %s45 = sshll.u32 %s3, 4
      %s46 = int_to_ptr.hbm [resolvable:$true] %s45
      %s47 = sshll.u32 [#allocation6], 4
      %s48 = int_to_ptr.vmem [resolvable:$true] %s47
      %53 = dma.hbm_to_vmem [thread:$0]  %s46, 512, %s48, [#allocation5], 128, 128, 8
    $region17: #{mixture_gaussians_net.1} parent=1 // pred_fallthru
      _
    // Predicated region
    $region18: #{mixture_gaussians_net.1} parent=1 // pred_check
      _
    $region19: #{mixture_gaussians_net.1} parent=1 // pred_check_branch
      %55 = sbr.rel (0) target = $region21
    $region20: #{mixture_gaussians_net.1} parent=1 // pred_region
      _
    $region21: #{mixture_gaussians_net.1} parent=1 // pred_fallthru
      _
    // Predicated region
    $region22: #{mixture_gaussians_net.1} parent=1 // pred_check
      _
    $region23: #{mixture_gaussians_net.1} parent=1 // pred_check_branch
      %57 = sbr.rel (0) target = $region25
    $region24: #{mixture_gaussians_net.1} parent=1 // pred_region
      %59 = vsyncadd [#allocation8], 0
      %s60 = sshll.u32 %s5, 4
      %s61 = int_to_ptr.hbm [resolvable:$true] %s60
      %s62 = sshll.u32 [#allocation7], 4
      %s63 = int_to_ptr.vmem [resolvable:$true] %s62
      %68 = dma.hbm_to_vmem [thread:$0]  %s61, 512, %s63, [#allocation8], 128, 128, 8
    $region25: #{mixture_gaussians_net.1} parent=1 // pred_fallthru
      _
    // Predicated region
    $region26: #{mixture_gaussians_net.1} parent=1 // pred_check
      _
    $region27: #{mixture_gaussians_net.1} parent=1 // pred_check_branch
      %70 = sbr.rel (0) target = $region29
    $region28: #{mixture_gaussians_net.1} parent=1 // pred_region
      _
    $region29: #{mixture_gaussians_net.1} parent=1 // pred_fallthru
      _
    // Predicated region
    $region30: #{mixture_gaussians_net.1} parent=1 // pred_check
      _
    $region31: #{mixture_gaussians_net.1} parent=1 // pred_check_branch
      %72 = sbr.rel (0) target = $region33
    $region32: #{mixture_gaussians_net.1} parent=1 // pred_region
      %74 = dma.done [#allocation3], 128
    $region33: #{mixture_gaussians_net.1} parent=1 // pred_fallthru
      _
    // Predicated region
    $region34: #{mixture_gaussians_net.1} parent=1 // pred_check
      _
    $region35: #{mixture_gaussians_net.1} parent=1 // pred_check_branch
      %76 = sbr.rel (0) target = $region37
    $region36: #{mixture_gaussians_net.1} parent=1 // pred_region
      %78 = dma.done [#allocation5], 512
    $region37: #{mixture_gaussians_net.1} parent=1 // pred_fallthru
      _
    // Predicated region
    $region38: #{mixture_gaussians_net.1} parent=1 // pred_check
      _
    $region39: #{mixture_gaussians_net.1} parent=1 // pred_check_branch
      %80 = sbr.rel (0) target = $region41
    $region40: #{mixture_gaussians_net.1} parent=1 // pred_region
      %82 = dma.done [#allocation5], 512
    $region41: #{mixture_gaussians_net.1} parent=1 // pred_fallthru
      _
    // Predicated region
    $region42: #{mixture_gaussians_net.1} parent=1 // pred_check
      _
    $region43: #{mixture_gaussians_net.1} parent=1 // pred_check_branch
      %84 = sbr.rel (0) target = $region45
    $region44: #{mixture_gaussians_net.1} parent=1 // pred_region
      %86 = dma.done [#allocation8], 512
    $region45: #{mixture_gaussians_net.1} parent=1 // pred_fallthru
      _
    %v87 = vld [vmem:[#allocation2] sm:$0xff]
    %v88 = vld [vmem:[#allocation4] sm:$0xff]
    %v89 = vld [vmem:[#allocation4 + $0x8] sm:$0xff]
    %v90 = vld [vmem:[#allocation4 + $0x10] sm:$0xff]
    %v91 = vld [vmem:[#allocation4 + $0x18] sm:$0xff]
    %v92 = vld [vmem:[%s2] sm:$0x1]
    %v94 = vperm.slane %v92, 0
    %vm96 = vcmask 261120
    %v98 = vsel %vm96, %v87, 0
    %100 = vmatpush.msra.mxu0 0.0
    %101 = vmatpush.msra.mxu0 0.0
    %102 = vmatpush.msra.mxu0 0.0
    %103 = vmatpush.msra.mxu0 0.0
    %104 = vmatpush.msra.mxu0 0.0
    %105 = vmatpush.msra.mxu0 0.0
    %106 = vmatpush.msra.mxu0 0.0
    %107 = vmatpush.msra.mxu0 0.0
    %108 = vmatpush.msra.mxu0 0.0
    %109 = vmatpush.msra.mxu0 0.0
    %110 = vmatpush.msra.mxu0 0.0
    %111 = vmatpush.msra.mxu0 0.0
    %112 = vmatpush.msra.mxu0 %v91
    %113 = vmatpush.msra.mxu0 %v90
    %114 = vmatpush.msra.mxu0 %v89
    %115 = vmatpush.msra.mxu0 %v88
    %116 = vmatmul.f32.gmra.mxu0 %v98
    %v117 = vpop.f32.mrf.mxu0
    %v118 = vadd.f32 %v94, %v117
    %119 = vdwg.mxu0
    %v120 = vmax.f32 %v118, 0.0
    %v121 = vld [vmem:[#allocation6] sm:$0xff]
    %v122 = vld [vmem:[#allocation6 + $0x8] sm:$0xff]
    %v123 = vld [vmem:[#allocation6 + $0x10] sm:$0xff]
    %v124 = vld [vmem:[#allocation6 + $0x18] sm:$0xff]
    %v125 = vld [vmem:[%s4] sm:$0x1]
    %v127 = vperm.slane %v125, 0
    %v130 = vsel %vm96, %v120, 0
    %132 = vmatpush.msra.mxu0 0.0
    %133 = vmatpush.msra.mxu0 0.0
    %134 = vmatpush.msra.mxu0 0.0
    %135 = vmatpush.msra.mxu0 0.0
    %136 = vmatpush.msra.mxu0 0.0
    %137 = vmatpush.msra.mxu0 0.0
    %138 = vmatpush.msra.mxu0 0.0
    %139 = vmatpush.msra.mxu0 0.0
    %140 = vmatpush.msra.mxu0 0.0
    %141 = vmatpush.msra.mxu0 0.0
    %142 = vmatpush.msra.mxu0 0.0
    %143 = vmatpush.msra.mxu0 0.0
    %144 = vmatpush.msra.mxu0 %v124
    %145 = vmatpush.msra.mxu0 %v123
    %146 = vmatpush.msra.mxu0 %v122
    %147 = vmatpush.msra.mxu0 %v121
    %148 = vmatmul.f32.gmra.mxu0 %v130
    %v149 = vpop.f32.mrf.mxu0
    %v150 = vadd.f32 %v127, %v149
    %151 = vdwg.mxu0
    %v152 = vmax.f32 %v150, 0.0
    %v153 = vld [vmem:[#allocation7] sm:$0xff]
    %v154 = vld [vmem:[#allocation7 + $0x8] sm:$0xff]
    %v155 = vld [vmem:[#allocation7 + $0x10] sm:$0xff]
    %v156 = vld [vmem:[#allocation7 + $0x18] sm:$0xff]
    %v157 = vld [vmem:[%s6] sm:$0x1]
    %v159 = vperm.slane %v157, 0
    %v162 = vsel %vm96, %v152, 0
    %164 = vmatpush.msra.mxu0 0.0
    %165 = vmatpush.msra.mxu0 0.0
    %166 = vmatpush.msra.mxu0 0.0
    %167 = vmatpush.msra.mxu0 0.0
    %168 = vmatpush.msra.mxu0 0.0
    %169 = vmatpush.msra.mxu0 0.0
    %170 = vmatpush.msra.mxu0 0.0
    %171 = vmatpush.msra.mxu0 0.0
    %172 = vmatpush.msra.mxu0 0.0
    %173 = vmatpush.msra.mxu0 0.0
    %174 = vmatpush.msra.mxu0 0.0
    %175 = vmatpush.msra.mxu0 0.0
    %176 = vmatpush.msra.mxu0 %v156
    %177 = vmatpush.msra.mxu0 %v155
    %178 = vmatpush.msra.mxu0 %v154
    %179 = vmatpush.msra.mxu0 %v153
    %180 = vmatmul.f32.gmra.mxu0 %v162
    %v181 = vpop.f32.mrf.mxu0
    %v182 = vadd.f32 %v159, %v181
    %183 = vdwg.mxu0
    %v184 = vlaneseq
    %v185 = vand.u32 %v184, 127
    %vm186 = vcmp.lt.s32.totalorder %v185, 4
    %vm187 = vcmp.ge.s32.totalorder %v185, 4
    %vm188 = vcmp.lt.s32.totalorder %v185, 36
    %vm189 = vmand %vm187, %vm188
    %v190 = vsel %vm186, 1, 0
    %vm191 = vcmp.eq.s32.totalorder %v190, 1
    %v192 = vsel %vm191, %v182, -1e+30
    %193 = vmax.xlane.f32.xlu0 %v192
    %v194 = vpop.xlane.xlu0 %193
    %v195 = vsub.f32 %v182, %v194
    %v196 = vsub.f32 0.0, %v182
    %v197 = vsel %vm191, %v195, %v196
    %v198 = vmin.f32 %v197, 30.0
    %v199 = vmul.f32 %v198, 1.442695
    %v200 = vpow.pop %v199
    %v201 = vsel %vm191, %v200, 0.0
    %202 = vadd.xlane.f32.xlu0 %v201
    %v203 = vpop.xlane.xlu0 %202
    %v204 = vsel %vm191, %v200, 1.0
    %v205 = vadd.f32 %v200, 1.0
    %v206 = vsel %vm191, %v203, %v205
    %v207 = vrcp.pop %v206
    %v208 = vmul.f32 %v206, %v207
    %v209 = vsub.f32 1.0, %v208
    %v210 = vmul.f32 %v207, %v209
    %v211 = vadd.f32 %v207, %v210
    %vm212 = vweird.f32 %v206
    %vm213 = vweird.f32 %v207
    %vm214 = vmor %vm212, %vm213
    %v215 = vsel %vm214, %v207, %v211
    %v216 = vand.u32 2147483647, %v206
    %vm217 = vcmp.eq.f32.partialorder %v216, 8.507059e+37
    %v218 = vand.u32 %v206, 2147483648
    %v219 = vor.u32 1.1754944e-38, %v218
    %v220 = vsel %vm217, %v219, %v215
    %v221 = vmul.f32 %v204, %v220
    %v222 = vsel %vm189, 1, 0
    %vm223 = vcmp.eq.s32.totalorder %v222, 1
    %v224 = vsel %vm223, %v182, %v221
    %225 = vst [vmem:[%s7] sm:$0xff] %v224
    // Predicated region
    $region46: #{mixture_gaussians_net.1} parent=1 // pred_check
      _
    $region47: #{mixture_gaussians_net.1} parent=1 // pred_check_branch
      %227 = sbr.rel (0) target = $region49
    $region48: #{mixture_gaussians_net.1} parent=1 // pred_region
      _
    $region49: #{mixture_gaussians_net.1} parent=1 // pred_fallthru
      _
    // Predicated region
    $region50: #{mixture_gaussians_net.1} parent=1 // pred_check
      _
    $region51: #{mixture_gaussians_net.1} parent=1 // pred_check_branch
      %229 = sbr.rel (0) target = $region53
    $region52: #{mixture_gaussians_net.1} parent=1 // pred_region
      _
    $region53: #{mixture_gaussians_net.1} parent=1 // pred_fallthru
      _
    %230 = vsyncpa [#allocation3], 1
    %231 = vsyncpa [#allocation5], 1
    %232 = vsyncpa [#allocation8], 1

</llo_original>
